<compile_context>
chip_gen: v7x
topology: tpu7x:2x2x1
jax: 0.10.0
libtpu: 0.0.40
codegen_flags: <defaults>
</compile_context>

<pallas_src>
from collections import OrderedDict
from typing import Iterable, List, Union

import jax
import jax.numpy as jnp
from jax.experimental import pallas as pl
from jax.experimental.pallas import tpu as pltpu

# ------------------------------- config ------------------------------------
B = 2            # batch
S = 8            # sequence length
H = 32           # hidden size (valid lanes)
F = 64           # FFN intermediate size (valid lanes)
PAD = 128        # lane width: H and F are zero-padded to this
VOCAB = 100
LN_EPS = 1e-5
SCALE = 1.0 / (H ** 0.5)
M = B * S        # flattened row count

# rows of the packed per-channel vector slab ([8, PAD])
_LN1_G, _LN1_B, _B1, _B2, _LN2_G, _LN2_B = 0, 1, 2, 3, 4, 5


# --------------------------- Pallas kernel ---------------------------------
def encoder_kernel(
    xslab_ref,   # [2M, PAD] f32: rows 0:M = padded activations, rows M:2M = attn bias
    wattn_ref,   # [2*PAD, PAD] bf16: rows 0:PAD = Wqk (= SCALE*Wq@Wk^T), rows PAD: = Wvo (= Wv@Wo)
    wffn_ref,    # [2*PAD, PAD] bf16: rows 0:PAD = W1, rows PAD: = W2 (both zero-padded)
    vec_ref,     # [8, PAD]    f32: ln1_g / ln1_b / b1 / b2 / ln2_g / ln2_b (zero-padded)
    out_ref,     # [M, PAD]    f32: padded last_hidden_state (unpadded by caller)
):
    x = xslab_ref[0:M, :]                    # [M, PAD] f32, lanes >= H are exactly zero
    bias = xslab_ref[M:2 * M, 0:M]           # [M, M]   f32 additive attention bias
    xb = x.astype(jnp.bfloat16)

    vec = vec_ref[...]                       # [8, PAD] f32
    ln1_g = vec[_LN1_G:_LN1_G + 1, :]
    ln1_b = vec[_LN1_B:_LN1_B + 1, :]
    b1    = vec[_B1:_B1 + 1, :]
    b2    = vec[_B2:_B2 + 1, :]
    ln2_g = vec[_LN2_G:_LN2_G + 1, :]
    ln2_b = vec[_LN2_B:_LN2_B + 1, :]

    wqk = wattn_ref[0:PAD, :]                # [PAD, PAD] bf16
    wvo = wattn_ref[PAD:2 * PAD, :]
    w1  = wffn_ref[0:PAD, :]
    w2  = wffn_ref[PAD:2 * PAD, :]

    # --- attention on the flat slab (no reshape, no batched einsum) ---------
    # scores = (x @ (SCALE * Wq Wk^T)) @ x^T    (contract last dims, no transpose)
    t = jnp.dot(xb, wqk, preferred_element_type=jnp.float32)          # [M, PAD]
    scores = jax.lax.dot_general(
        t.astype(jnp.bfloat16), xb, (((1,), (1,)), ((), ())),
        preferred_element_type=jnp.float32)                           # [M, M]
    scores = scores + bias                   # block-diagonal + key-mask bias

    mx = jnp.max(scores, axis=-1, keepdims=True)
    e = jnp.exp(scores - mx)
    p = e * pl.reciprocal(jnp.sum(e, axis=-1, keepdims=True), approx=True)

    xv = jnp.dot(xb, wvo, preferred_element_type=jnp.float32)         # [M, PAD]
    attn = jnp.dot(p.astype(jnp.bfloat16), xv.astype(jnp.bfloat16),
                   preferred_element_type=jnp.float32)                # [M, PAD]

    # lane-validity mask for LayerNorm stats (padded lanes of h are zero, but
    # the centered term (h - mu) is not — mask it before squaring)
    lane = jax.lax.broadcasted_iota(jnp.int32, (M, PAD), 1)
    valid = (lane < H).astype(jnp.float32)
    inv_h = 1.0 / H

    # --- residual + LayerNorm 1 (f32) ---------------------------------------
    h = x + attn                             # padded lanes stay exactly zero
    mu = jnp.sum(h, axis=-1, keepdims=True) * inv_h
    d = (h - mu) * valid
    var = jnp.sum(d * d, axis=-1, keepdims=True) * inv_h
    h1 = d * jax.lax.rsqrt(var + LN_EPS) * ln1_g + ln1_b   # padded lanes -> 0

    # --- FFN with tanh-GELU (bf16 matmuls, f32 elementwise) ------------------
    f = jnp.dot(h1.astype(jnp.bfloat16), w1, preferred_element_type=jnp.float32) + b1
    f = 0.5 * f * (1.0 + jnp.tanh(0.7978845608028654 * (f + 0.044715 * f * f * f)))
    f = jnp.dot(f.astype(jnp.bfloat16), w2, preferred_element_type=jnp.float32) + b2

    # --- residual + LayerNorm 2 ----------------------------------------------
    h2 = h1 + f                              # padded lanes stay exactly zero
    mu2 = jnp.sum(h2, axis=-1, keepdims=True) * inv_h
    d2 = (h2 - mu2) * valid
    var2 = jnp.sum(d2 * d2, axis=-1, keepdims=True) * inv_h
    out_ref[...] = d2 * jax.lax.rsqrt(var2 + LN_EPS) * ln2_g + ln2_b


# ------------------------- host-side param packing ---------------------------
def _pad2(a, rows, cols):
    return jnp.zeros((rows, cols), a.dtype).at[: a.shape[0], : a.shape[1]].set(a)


def pack_params(params):
    """Fold + pad weights into 3 lane-dense slabs (done once)."""
    wqk = SCALE * (params["wq"] @ params["wk"].T)        # [H, H]
    wvo = params["wv"] @ params["wo"]                    # [H, H]
    w_attn = jnp.concatenate(
        [_pad2(wqk, PAD, PAD), _pad2(wvo, PAD, PAD)], axis=0
    ).astype(jnp.bfloat16)                               # [2*PAD, PAD]

    w_ffn = jnp.concatenate(
        [_pad2(params["w1"], PAD, PAD), _pad2(params["w2"], PAD, PAD)], axis=0
    ).astype(jnp.bfloat16)                               # [2*PAD, PAD]

    vecs = jnp.zeros((8, PAD), jnp.float32)
    vecs = vecs.at[_LN1_G, :H].set(params["ln1_g"])
    vecs = vecs.at[_LN1_B, :H].set(params["ln1_b"])
    vecs = vecs.at[_B1, :F].set(params["b1"])
    vecs = vecs.at[_B2, :H].set(params["b2"])
    vecs = vecs.at[_LN2_G, :H].set(params["ln2_g"])
    vecs = vecs.at[_LN2_B, :H].set(params["ln2_b"])      # [8, PAD]

    return {"emb": params["emb"], "w_attn": w_attn, "w_ffn": w_ffn,
            "vecs": vecs, "wp": params["wp"]}


def core_model_pallas(packed, input_ids, attention_mask):
    """Synthetic BERT-style core model. Returns a dict (like HF ModelOutput)."""
    # glue: embedding gather (plain XLA), flatten + lane-pad the activations
    x = jnp.take(packed["emb"], input_ids, axis=0).astype(jnp.float32)   # [B, S, H]
    x_pad = jnp.zeros((M, PAD), jnp.float32).at[:, :H].set(x.reshape(M, H))

    # precomputed additive attention bias: 0 where same-batch & key valid, else -1e9
    mask_flat = attention_mask.astype(jnp.float32).reshape(M)
    batch_ids = jnp.arange(M, dtype=jnp.int32) // S
    same_batch = batch_ids[:, None] == batch_ids[None, :]
    bias = jnp.where(same_batch, (1.0 - mask_flat)[None, :] * -1e9, -1e9)  # [M, M]
    bias_pad = jnp.zeros((M, PAD), jnp.float32).at[:, :M].set(bias)

    x_slab = jnp.concatenate([x_pad, bias_pad], axis=0)                    # [2M, PAD]

    grid_spec = pltpu.PrefetchScalarGridSpec(
        num_scalar_prefetch=0,
        grid=(1,),                                    # whole slab in one step
        in_specs=[
            pl.BlockSpec((2 * M, PAD), lambda i: (0, 0)),      # activations + bias
            pl.BlockSpec((2 * PAD, PAD), lambda i: (0, 0)),    # Wqk / Wvo
            pl.BlockSpec((2 * PAD, PAD), lambda i: (0, 0)),    # W1 / W2
            pl.BlockSpec((8, PAD), lambda i: (0, 0)),          # biases / LN params
        ],
        out_specs=pl.BlockSpec((M, PAD), lambda i: (0, 0)),
    )

    hidden_pad = pl.pallas_call(
        encoder_kernel,
        out_shape=jax.ShapeDtypeStruct((M, PAD), jnp.float32),
        grid_spec=grid_spec,
        compiler_params=pltpu.CompilerParams(dimension_semantics=("arbitrary",)),
    )(x_slab, packed["w_attn"], packed["w_ffn"], packed["vecs"])

    last_hidden = hidden_pad[:, :H].reshape(B, S, H)
    # pooler kept out of the kernel (tiny [B,H]@[H,H] matmul + tanh)
    pooled = jnp.tanh(last_hidden[:, 0, :] @ packed["wp"])                 # [B, H]
    return {"last_hidden_state": last_hidden, "pooler_output": pooled}


# ----------------------- pure-JAX reference (f32) ----------------------------
def core_model_reference(params, input_ids, attention_mask):
    x = jnp.take(params["emb"], input_ids, axis=0).astype(jnp.float32)
    bias = (1.0 - attention_mask.astype(jnp.float32))[:, None, :] * -1e9
    q = x @ params["wq"]
    k = x @ params["wk"]
    v = x @ params["wv"]
    scores = jnp.einsum("bqd,bkd->bqk", q, k) * SCALE + bias
    p = jax.nn.softmax(scores, axis=-1)
    attn = jnp.einsum("bqk,bkd->bqd", p, v) @ params["wo"]
    h = x + attn
    mu = jnp.mean(h, -1, keepdims=True)
    var = jnp.mean((h - mu) ** 2, -1, keepdims=True)
    h1 = (h - mu) * jax.lax.rsqrt(var + LN_EPS) * params["ln1_g"] + params["ln1_b"]
    f = h1 @ params["w1"] + params["b1"]
    f = 0.5 * f * (1.0 + jnp.tanh(0.7978845608028654 * (f + 0.044715 * f ** 3)))
    f = f @ params["w2"] + params["b2"]
    h2 = h1 + f
    mu2 = jnp.mean(h2, -1, keepdims=True)
    var2 = jnp.mean((h2 - mu2) ** 2, -1, keepdims=True)
    out = (h2 - mu2) * jax.lax.rsqrt(var2 + LN_EPS) * params["ln2_g"] + params["ln2_b"]
    pooled = jnp.tanh(out[:, 0, :] @ params["wp"])
    return {"last_hidden_state": out, "pooler_output": pooled}


# -------------------- TransformerWrapper semantics (JAX) --------------------
def flatten_outputs(outputs: Union[jnp.ndarray, Iterable]) -> List[jnp.ndarray]:
    new_outputs = []
    for output in outputs:
        if isinstance(output, jnp.ndarray):
            new_outputs.append(output)
        else:
            new_outputs.extend(flatten_outputs(output))
    return new_outputs


class TransformerWrapper:
    """JAX/Pallas equivalent of nebullvm's TransformerWrapper: maps positional
    args to the core model's named inputs and flattens its outputs."""

    def __init__(self, core_model, encoded_input):
        self.core_model = core_model
        self.inputs_types = OrderedDict()
        for key, value in encoded_input.items():
            self.inputs_types[key] = value.dtype

    def __call__(self, *args):
        inputs = {key: value for key, value in zip(self.inputs_types.keys(), args)}
        outputs = self.core_model(**inputs)
        outputs = outputs.values() if isinstance(outputs, dict) else outputs
        return tuple(flatten_outputs(outputs))


# --------------------------------- main -------------------------------------
def init_params(key):
    ks = jax.random.split(key, 10)
    s = 0.05
    return {
        "emb":   s * jax.random.normal(ks[0], (VOCAB, H), jnp.float32),
        "wq":    s * jax.random.normal(ks[1], (H, H), jnp.float32),
        "wk":    s * jax.random.normal(ks[2], (H, H), jnp.float32),
        "wv":    s * jax.random.normal(ks[3], (H, H), jnp.float32),
        "wo":    s * jax.random.normal(ks[4], (H, H), jnp.float32),
        "ln1_g": jnp.ones((H,), jnp.float32),
        "ln1_b": jnp.zeros((H,), jnp.float32),
        "w1":    s * jax.random.normal(ks[5], (H, F), jnp.float32),
        "b1":    jnp.zeros((F,), jnp.float32),
        "w2":    s * jax.random.normal(ks[6], (F, H), jnp.float32),
        "b2":    jnp.zeros((H,), jnp.float32),
        "ln2_g": jnp.ones((H,), jnp.float32),
        "ln2_b": jnp.zeros((H,), jnp.float32),
        "wp":    s * jax.random.normal(ks[7], (H, H), jnp.float32),
    }


if __name__ == "__main__":
    key = jax.random.PRNGKey(0)
    pkey, ikey = jax.random.split(key)
    params = init_params(pkey)
    packed = pack_params(params)

    input_ids = jax.random.randint(ikey, (B, S), 0, VOCAB, dtype=jnp.int32)
    attention_mask = jnp.ones((B, S), dtype=jnp.int32)
    attention_mask = attention_mask.at[1, S - 2:].set(0)   # exercise masking

    # encoded_input defines the argument name -> dtype ordering, as in HF tokenizers
    encoded_input = OrderedDict(
        [("input_ids", input_ids), ("attention_mask", attention_mask)]
    )

    def core_model(input_ids, attention_mask):
        return core_model_pallas(packed, input_ids, attention_mask)

    wrapper = TransformerWrapper(core_model, encoded_input)

    # positional args, zipped to names by the wrapper (as in the PyTorch module)
    outputs = wrapper(input_ids, attention_mask)
    outputs = jax.block_until_ready(outputs)

    assert isinstance(outputs, tuple) and len(outputs) == 2
    assert outputs[0].shape == (B, S, H)
    assert outputs[1].shape == (B, H)
    assert all(bool(jnp.all(jnp.isfinite(o))) for o in outputs)

    # numerical check against a pure-JAX f32 reference (bf16 MXU operands,
    # host-folded Wqk/Wvo, approx softmax reciprocal -> generous tolerance)
    ref = core_model_reference(params, input_ids, attention_mask)
    ref_outputs = tuple(flatten_outputs(ref.values()))
    for got, want in zip(outputs, ref_outputs):
        assert jnp.allclose(got, want, atol=5e-2, rtol=5e-2), float(
            jnp.max(jnp.abs(got - want))
        )

    print("KERNEL_OK")
</pallas_src>

<mosaic_0001>
module attributes {stable_mosaic.version = 11 : i64} {
  func.func @encoder_kernel(%arg0: i32, %arg1: memref<32x128xf32, #tpu.memory_space<vmem>>, %arg2: memref<256x128xbf16, #tpu.memory_space<vmem>>, %arg3: memref<256x128xbf16, #tpu.memory_space<vmem>>, %arg4: memref<8x128xf32, #tpu.memory_space<vmem>>, %arg5: memref<16x128xf32, #tpu.memory_space<vmem>>) attributes {dimension_semantics = [#tpu.dimension_semantics<arbitrary>], iteration_bounds = array<i64: 1>, scalar_prefetch = 0 : i64, scratch_operands = 0 : i64, tpu.core_type = #tpu.core_type<tc>, window_params = [{pipeline_mode = #tpu.pipeline_mode<synchronous>, transform_indices = @transform_0, window_bounds = array<i64: 32, 128>}, {pipeline_mode = #tpu.pipeline_mode<synchronous>, transform_indices = @transform_1, window_bounds = array<i64: 256, 128>}, {pipeline_mode = #tpu.pipeline_mode<synchronous>, transform_indices = @transform_2, window_bounds = array<i64: 256, 128>}, {pipeline_mode = #tpu.pipeline_mode<synchronous>, transform_indices = @transform_3, window_bounds = array<i64: 8, 128>}, {pipeline_mode = #tpu.pipeline_mode<synchronous>, transform_indices = @transform_4, window_bounds = array<i64: 16, 128>}]} {
    %c0 = arith.constant 0 : index
    %c0_0 = arith.constant 0 : index
    %0 = vector.load %arg1[%c0, %c0_0] : memref<32x128xf32, #tpu.memory_space<vmem>>, vector<16x128xf32>
    %c16 = arith.constant 16 : index
    %c0_1 = arith.constant 0 : index
    %1 = vector.load %arg1[%c16, %c0_1] : memref<32x128xf32, #tpu.memory_space<vmem>>, vector<16x16xf32>
    %2 = arith.truncf %0 : vector<16x128xf32> to vector<16x128xbf16>
    %c0_2 = arith.constant 0 : index
    %c0_3 = arith.constant 0 : index
    %3 = vector.load %arg4[%c0_2, %c0_3] : memref<8x128xf32, #tpu.memory_space<vmem>>, vector<8x128xf32>
    %4 = vector.extract_strided_slice %3 {offsets = [0, 0], sizes = [1, 128], strides = [1, 1]} : vector<8x128xf32> to vector<1x128xf32>
    %5 = vector.extract_strided_slice %3 {offsets = [1, 0], sizes = [1, 128], strides = [1, 1]} : vector<8x128xf32> to vector<1x128xf32>
    %6 = vector.extract_strided_slice %3 {offsets = [2, 0], sizes = [1, 128], strides = [1, 1]} : vector<8x128xf32> to vector<1x128xf32>
    %7 = vector.extract_strided_slice %3 {offsets = [3, 0], sizes = [1, 128], strides = [1, 1]} : vector<8x128xf32> to vector<1x128xf32>
    %8 = vector.extract_strided_slice %3 {offsets = [4, 0], sizes = [1, 128], strides = [1, 1]} : vector<8x128xf32> to vector<1x128xf32>
    %9 = vector.extract_strided_slice %3 {offsets = [5, 0], sizes = [1, 128], strides = [1, 1]} : vector<8x128xf32> to vector<1x128xf32>
    %c0_4 = arith.constant 0 : index
    %c0_5 = arith.constant 0 : index
    %10 = vector.load %arg2[%c0_4, %c0_5] : memref<256x128xbf16, #tpu.memory_space<vmem>>, vector<128x128xbf16>
    %c128 = arith.constant 128 : index
    %c0_6 = arith.constant 0 : index
    %11 = vector.load %arg2[%c128, %c0_6] : memref<256x128xbf16, #tpu.memory_space<vmem>>, vector<128x128xbf16>
    %c0_7 = arith.constant 0 : index
    %c0_8 = arith.constant 0 : index
    %12 = vector.load %arg3[%c0_7, %c0_8] : memref<256x128xbf16, #tpu.memory_space<vmem>>, vector<128x128xbf16>
    %c128_9 = arith.constant 128 : index
    %c0_10 = arith.constant 0 : index
    %13 = vector.load %arg3[%c128_9, %c0_10] : memref<256x128xbf16, #tpu.memory_space<vmem>>, vector<128x128xbf16>
    %cst = arith.constant dense<0.000000e+00> : vector<16x128xf32>
    %14 = tpu.matmul %2, %10, %cst {dimension_numbers = #tpu.dot_dimension_numbers<[1], [0], [0], [1], [0, 0, 1, 1], [], []>} : vector<16x128xbf16>, vector<128x128xbf16>, vector<16x128xf32> -> vector<16x128xf32>
    %15 = arith.truncf %14 : vector<16x128xf32> to vector<16x128xbf16>
    %cst_11 = arith.constant dense<0.000000e+00> : vector<16x16xf32>
    %16 = tpu.matmul %15, %2, %cst_11 {dimension_numbers = #tpu.dot_dimension_numbers<[1], [1], [0], [0], [0, 0, 1, 0], [], []>} : vector<16x128xbf16>, vector<16x128xbf16>, vector<16x16xf32> -> vector<16x16xf32>
    %17 = arith.addf %16, %1 : vector<16x16xf32>
    %cst_12 = arith.constant dense<0xFF800000> : vector<16xf32>
    %18 = vector.multi_reduction <maximumf>, %17, %cst_12 [1] : vector<16x16xf32> to vector<16xf32>
    %19 = vector.shape_cast %18 : vector<16xf32> to vector<16x1xf32>
    %20 = vector.broadcast %19 : vector<16x1xf32> to vector<16x16xf32>
    %21 = arith.subf %17, %20 : vector<16x16xf32>
    %22 = math.exp %21 : vector<16x16xf32>
    %cst_13 = arith.constant dense<0.000000e+00> : vector<16xf32>
    %23 = vector.multi_reduction <add>, %22, %cst_13 [1] : vector<16x16xf32> to vector<16xf32>
    %24 = vector.shape_cast %23 : vector<16xf32> to vector<16x1xf32>
    %25 = tpu.reciprocal %24 {approx = true} : vector<16x1xf32> -> vector<16x1xf32>
    %26 = vector.broadcast %25 : vector<16x1xf32> to vector<16x16xf32>
    %27 = arith.mulf %22, %26 : vector<16x16xf32>
    %cst_14 = arith.constant dense<0.000000e+00> : vector<16x128xf32>
    %28 = tpu.matmul %2, %11, %cst_14 {dimension_numbers = #tpu.dot_dimension_numbers<[1], [0], [0], [1], [0, 0, 1, 1], [], []>} : vector<16x128xbf16>, vector<128x128xbf16>, vector<16x128xf32> -> vector<16x128xf32>
    %29 = arith.truncf %27 : vector<16x16xf32> to vector<16x16xbf16>
    %30 = arith.truncf %28 : vector<16x128xf32> to vector<16x128xbf16>
    %cst_15 = arith.constant dense<0.000000e+00> : vector<16x128xf32>
    %31 = tpu.matmul %29, %30, %cst_15 {dimension_numbers = #tpu.dot_dimension_numbers<[1], [0], [0], [1], [0, 0, 1, 1], [], []>} : vector<16x16xbf16>, vector<16x128xbf16>, vector<16x128xf32> -> vector<16x128xf32>
    %32 = tpu.iota {dimensions = array<i32: 1>} : vector<16x128xi32>
    %c32_i32 = arith.constant 32 : i32
    %33 = vector.broadcast %c32_i32 : i32 to vector<16x128xi32>
    %34 = arith.cmpi slt, %32, %33 : vector<16x128xi32>
    %35 = arith.extui %34 : vector<16x128xi1> to vector<16x128xi32>
    %36 = arith.sitofp %35 : vector<16x128xi32> to vector<16x128xf32>
    %37 = arith.addf %0, %31 : vector<16x128xf32>
    %cst_16 = arith.constant dense<0.000000e+00> : vector<16xf32>
    %38 = vector.multi_reduction <add>, %37, %cst_16 [1] : vector<16x128xf32> to vector<16xf32>
    %39 = vector.shape_cast %38 : vector<16xf32> to vector<16x1xf32>
    %cst_17 = arith.constant 3.125000e-02 : f32
    %40 = vector.broadcast %cst_17 : f32 to vector<16x1xf32>
    %41 = arith.mulf %39, %40 : vector<16x1xf32>
    %42 = vector.broadcast %41 : vector<16x1xf32> to vector<16x128xf32>
    %43 = arith.subf %37, %42 : vector<16x128xf32>
    %44 = arith.mulf %43, %36 : vector<16x128xf32>
    %45 = arith.mulf %44, %44 : vector<16x128xf32>
    %cst_18 = arith.constant dense<0.000000e+00> : vector<16xf32>
    %46 = vector.multi_reduction <add>, %45, %cst_18 [1] : vector<16x128xf32> to vector<16xf32>
    %47 = vector.shape_cast %46 : vector<16xf32> to vector<16x1xf32>
    %cst_19 = arith.constant 3.125000e-02 : f32
    %48 = vector.broadcast %cst_19 : f32 to vector<16x1xf32>
    %49 = arith.mulf %47, %48 : vector<16x1xf32>
    %cst_20 = arith.constant 9.99999974E-6 : f32
    %50 = vector.broadcast %cst_20 : f32 to vector<16x1xf32>
    %51 = arith.addf %49, %50 : vector<16x1xf32>
    %52 = math.rsqrt %51 : vector<16x1xf32>
    %53 = vector.broadcast %52 : vector<16x1xf32> to vector<16x128xf32>
    %54 = arith.mulf %44, %53 : vector<16x128xf32>
    %55 = vector.broadcast %4 : vector<1x128xf32> to vector<16x128xf32>
    %56 = arith.mulf %54, %55 : vector<16x128xf32>
    %57 = vector.broadcast %5 : vector<1x128xf32> to vector<16x128xf32>
    %58 = arith.addf %56, %57 : vector<16x128xf32>
    %59 = arith.truncf %58 : vector<16x128xf32> to vector<16x128xbf16>
    %cst_21 = arith.constant dense<0.000000e+00> : vector<16x128xf32>
    %60 = tpu.matmul %59, %12, %cst_21 {dimension_numbers = #tpu.dot_dimension_numbers<[1], [0], [0], [1], [0, 0, 1, 1], [], []>} : vector<16x128xbf16>, vector<128x128xbf16>, vector<16x128xf32> -> vector<16x128xf32>
    %61 = vector.broadcast %6 : vector<1x128xf32> to vector<16x128xf32>
    %62 = arith.addf %60, %61 : vector<16x128xf32>
    %cst_22 = arith.constant 5.000000e-01 : f32
    %63 = vector.broadcast %cst_22 : f32 to vector<16x128xf32>
    %64 = arith.mulf %63, %62 : vector<16x128xf32>
    %cst_23 = arith.constant 4.471500e-02 : f32
    %65 = vector.broadcast %cst_23 : f32 to vector<16x128xf32>
    %66 = arith.mulf %65, %62 : vector<16x128xf32>
    %67 = arith.mulf %66, %62 : vector<16x128xf32>
    %68 = arith.mulf %67, %62 : vector<16x128xf32>
    %69 = arith.addf %62, %68 : vector<16x128xf32>
    %cst_24 = arith.constant 0.797884583 : f32
    %70 = vector.broadcast %cst_24 : f32 to vector<16x128xf32>
    %71 = arith.mulf %70, %69 : vector<16x128xf32>
    %72 = math.tanh %71 : vector<16x128xf32>
    %cst_25 = arith.constant 1.000000e+00 : f32
    %73 = vector.broadcast %cst_25 : f32 to vector<16x128xf32>
    %74 = arith.addf %73, %72 : vector<16x128xf32>
    %75 = arith.mulf %64, %74 : vector<16x128xf32>
    %76 = arith.truncf %75 : vector<16x128xf32> to vector<16x128xbf16>
    %cst_26 = arith.constant dense<0.000000e+00> : vector<16x128xf32>
    %77 = tpu.matmul %76, %13, %cst_26 {dimension_numbers = #tpu.dot_dimension_numbers<[1], [0], [0], [1], [0, 0, 1, 1], [], []>} : vector<16x128xbf16>, vector<128x128xbf16>, vector<16x128xf32> -> vector<16x128xf32>
    %78 = vector.broadcast %7 : vector<1x128xf32> to vector<16x128xf32>
    %79 = arith.addf %77, %78 : vector<16x128xf32>
    %80 = arith.addf %58, %79 : vector<16x128xf32>
    %cst_27 = arith.constant dense<0.000000e+00> : vector<16xf32>
    %81 = vector.multi_reduction <add>, %80, %cst_27 [1] : vector<16x128xf32> to vector<16xf32>
    %82 = vector.shape_cast %81 : vector<16xf32> to vector<16x1xf32>
    %cst_28 = arith.constant 3.125000e-02 : f32
    %83 = vector.broadcast %cst_28 : f32 to vector<16x1xf32>
    %84 = arith.mulf %82, %83 : vector<16x1xf32>
    %85 = vector.broadcast %84 : vector<16x1xf32> to vector<16x128xf32>
    %86 = arith.subf %80, %85 : vector<16x128xf32>
    %87 = arith.mulf %86, %36 : vector<16x128xf32>
    %88 = arith.mulf %87, %87 : vector<16x128xf32>
    %cst_29 = arith.constant dense<0.000000e+00> : vector<16xf32>
    %89 = vector.multi_reduction <add>, %88, %cst_29 [1] : vector<16x128xf32> to vector<16xf32>
    %90 = vector.shape_cast %89 : vector<16xf32> to vector<16x1xf32>
    %cst_30 = arith.constant 3.125000e-02 : f32
    %91 = vector.broadcast %cst_30 : f32 to vector<16x1xf32>
    %92 = arith.mulf %90, %91 : vector<16x1xf32>
    %cst_31 = arith.constant 9.99999974E-6 : f32
    %93 = vector.broadcast %cst_31 : f32 to vector<16x1xf32>
    %94 = arith.addf %92, %93 : vector<16x1xf32>
    %95 = math.rsqrt %94 : vector<16x1xf32>
    %96 = vector.broadcast %95 : vector<16x1xf32> to vector<16x128xf32>
    %97 = arith.mulf %87, %96 : vector<16x128xf32>
    %98 = vector.broadcast %8 : vector<1x128xf32> to vector<16x128xf32>
    %99 = arith.mulf %97, %98 : vector<16x128xf32>
    %100 = vector.broadcast %9 : vector<1x128xf32> to vector<16x128xf32>
    %101 = arith.addf %99, %100 : vector<16x128xf32>
    %c0_32 = arith.constant 0 : index
    %c0_33 = arith.constant 0 : index
    %102 = vector.load %arg5[%c0_32, %c0_33] : memref<16x128xf32, #tpu.memory_space<vmem>>, vector<16x128xf32>
    tpu.vector_store %arg5[%c0_32, %c0_33], %101 {strides = array<i32>} : memref<16x128xf32, #tpu.memory_space<vmem>>, vector<16x128xf32>,
    return
  }
  func.func @transform_0(%arg0: i32) -> (i32, i32) {
    %c0_i32 = arith.constant 0 : i32
    %c0_i32_0 = arith.constant 0 : i32
    %c0_i32_1 = arith.constant 0 : i32
    return %c0_i32, %c0_i32_0 : i32, i32
  }
  func.func @transform_1(%arg0: i32) -> (i32, i32) {
    %c0_i32 = arith.constant 0 : i32
    %c0_i32_0 = arith.constant 0 : i32
    %c0_i32_1 = arith.constant 0 : i32
    return %c0_i32, %c0_i32_0 : i32, i32
  }
  func.func @transform_2(%arg0: i32) -> (i32, i32) {
    %c0_i32 = arith.constant 0 : i32
    %c0_i32_0 = arith.constant 0 : i32
    %c0_i32_1 = arith.constant 0 : i32
    return %c0_i32, %c0_i32_0 : i32, i32
  }
  func.func @transform_3(%arg0: i32) -> (i32, i32) {
    %c0_i32 = arith.constant 0 : i32
    %c0_i32_0 = arith.constant 0 : i32
    %c0_i32_1 = arith.constant 0 : i32
    return %c0_i32, %c0_i32_0 : i32, i32
  }
  func.func @transform_4(%arg0: i32) -> (i32, i32) {
    %c0_i32 = arith.constant 0 : i32
    %c0_i32_0 = arith.constant 0 : i32
    %c0_i32_1 = arith.constant 0 : i32
    return %c0_i32, %c0_i32_0 : i32, i32
  }
}

</mosaic_0001>

<llo_original>
// kernel: tpu_custom_call.1
$region0: #{tpu_custom_call.1}
  #allocation0 [shape = 'u32[]', space=smem, size = 0x4, offset = 0x4, fixed_abs, tag = 'smem constant byte address 0x4 - core index']
  #allocation1 [shape = 'u32[144,128]{1,0:T(1,128)}', space=vmem, size = 0x12000, scoped, tag = 'internal scratch']
  %s0 = inlined_call_operand.hbm [shape: f32[32,128], index: 0, kind: input, shape index: {}]
  %s1 = inlined_call_operand.hbm [shape: bf16[256,128], index: 1, kind: input, shape index: {}]
  %s2 = inlined_call_operand.hbm [shape: bf16[256,128], index: 2, kind: input, shape index: {}]
  %s3 = inlined_call_operand.vmem [shape: f32[8,128], index: 3, kind: input, shape index: {}]
  %s4 = inlined_call_operand.hbm [shape: f32[16,128], index: 4, kind: output, shape index: {}]
  %s5 = sld [smem:[#allocation0]]
  $region38: #{tpu_custom_call.1} parent=0
    _
  %s7 = ssub.s32 1, %s5
  %s8 = scalar_select 0, %s7, %s5
  $region1: #{tpu_custom_call.1} parent=0
    #allocation2 [shape = 'u8[16384]{0}', space=vmem, size = 0x4000, scoped, tag = 'input window, operand 0, single buffered']
    #allocation3 [shape = 's32[1]{0}', space=sflag, size = 0x4, scoped, tag = 'scoped memory for tpu_custom_call.1']
    #allocation4 [shape = 's32[1]{0}', space=sflag, size = 0x4, scoped, tag = 'scoped memory for tpu_custom_call.1']
    #allocation5 [shape = 'u8[65536]{0}', space=vmem, size = 0x10000, scoped, tag = 'input window, operand 1, single buffered']
    #allocation6 [shape = 's32[1]{0}', space=sflag, size = 0x4, scoped, tag = 'scoped memory for tpu_custom_call.1']
    #allocation7 [shape = 'u8[65536]{0}', space=vmem, size = 0x10000, scoped, tag = 'input window, operand 2, single buffered']
    #allocation8 [shape = 'u8[8192]{0}', space=vmem, size = 0x2000, scoped, tag = 'output window, operand 0, single buffered']
    %9 = vsyncpa [#allocation3], 0
    %10 = vsyncpa [#allocation6], 0
    %11 = vsyncpa [#allocation4], 0
    // Predicated region
    $region2: #{tpu_custom_call.1} parent=1 // pred_check
      _
    $region3: #{tpu_custom_call.1} parent=1 // pred_check_branch
      %13 = sbr.rel (0) target = $region5
    $region4: #{tpu_custom_call.1} parent=1 // pred_region
      %s15 = ssub.s32 512, 512
      %16 = vsyncadd [#allocation3], %s15
      %s17 = sshll.u32 [#allocation2], 4
      %s18 = int_to_ptr.vmem [resolvable:$true] %s17
      %23 = dma.hbm_to_vmem [thread:$0]  %s0, 512, %s18, [#allocation3], 128, 128, 8
    $region5: #{tpu_custom_call.1} parent=1 // pred_fallthru
      _
    // Predicated region
    $region6: #{tpu_custom_call.1} parent=1 // pred_check
      _
    $region7: #{tpu_custom_call.1} parent=1 // pred_check_branch
      %25 = sbr.rel (0) target = $region9
    $region8: #{tpu_custom_call.1} parent=1 // pred_region
      %s27 = ssub.s32 2048, 2048
      %28 = vsyncadd [#allocation6], %s27
      %s29 = sshll.u32 [#allocation5], 4
      %s30 = int_to_ptr.vmem [resolvable:$true] %s29
      %35 = dma.hbm_to_vmem [thread:$0]  %s1, 2048, %s30, [#allocation6], 64, 64, 4
    $region9: #{tpu_custom_call.1} parent=1 // pred_fallthru
      _
    // Predicated region
    $region10: #{tpu_custom_call.1} parent=1 // pred_check
      _
    $region11: #{tpu_custom_call.1} parent=1 // pred_check_branch
      %37 = sbr.rel (0) target = $region13
    $region12: #{tpu_custom_call.1} parent=1 // pred_region
      %s39 = ssub.s32 2048, 2048
      %40 = vsyncadd [#allocation6], %s39
      %s41 = sshll.u32 [#allocation7], 4
      %s42 = int_to_ptr.vmem [resolvable:$true] %s41
      %47 = dma.hbm_to_vmem [thread:$0]  %s2, 2048, %s42, [#allocation6], 64, 64, 4
    $region13: #{tpu_custom_call.1} parent=1 // pred_fallthru
      _
    // Predicated region
    $region14: #{tpu_custom_call.1} parent=1 // pred_check
      _
    $region15: #{tpu_custom_call.1} parent=1 // pred_check_branch
      %49 = sbr.rel (0) target = $region17
    $region16: #{tpu_custom_call.1} parent=1 // pred_region
      _
    $region17: #{tpu_custom_call.1} parent=1 // pred_fallthru
      _
    // Predicated region
    $region18: #{tpu_custom_call.1} parent=1 // pred_check
      _
    $region19: #{tpu_custom_call.1} parent=1 // pred_check_branch
      %51 = sbr.rel (0) target = $region21
    $region20: #{tpu_custom_call.1} parent=1 // pred_region
      %52 = dma.done [#allocation3], 512
    $region21: #{tpu_custom_call.1} parent=1 // pred_fallthru
      _
    // Predicated region
    $region22: #{tpu_custom_call.1} parent=1 // pred_check
      _
    $region23: #{tpu_custom_call.1} parent=1 // pred_check_branch
      %54 = sbr.rel (0) target = $region25
    $region24: #{tpu_custom_call.1} parent=1 // pred_region
      %55 = dma.done [#allocation6], 2048
    $region25: #{tpu_custom_call.1} parent=1 // pred_fallthru
      _
    // Predicated region
    $region26: #{tpu_custom_call.1} parent=1 // pred_check
      _
    $region27: #{tpu_custom_call.1} parent=1 // pred_check_branch
      %57 = sbr.rel (0) target = $region29
    $region28: #{tpu_custom_call.1} parent=1 // pred_region
      %58 = dma.done [#allocation6], 2048
    $region29: #{tpu_custom_call.1} parent=1 // pred_fallthru
      _
    %v60 = vld [vmem:[#allocation2] sm:$0xff]
    %v61 = vld [vmem:[#allocation2 + $0x8] sm:$0xff]
    %v62 = vld [vmem:[#allocation2 + $0x10] sm:$0xff]
    %v63 = vld [vmem:[#allocation2 + $0x18] sm:$0xff]
    %v64 = vpack.c.bf16 %v61, %v60
    %v65 = vld [vmem:[%s3] sm:$0xff]
    %v66 = vld [vmem:[#allocation5] sm:$0xf]
    %v67 = vld [vmem:[#allocation5 + $0x4] sm:$0xf]
    %v68 = vld [vmem:[#allocation5 + $0x8] sm:$0xf]
    %v69 = vld [vmem:[#allocation5 + $0xc] sm:$0xf]
    %v70 = vld [vmem:[#allocation5 + $0x10] sm:$0xf]
    %v71 = vld [vmem:[#allocation5 + $0x14] sm:$0xf]
    %v72 = vld [vmem:[#allocation5 + $0x18] sm:$0xf]
    %v73 = vld [vmem:[#allocation5 + $0x1c] sm:$0xf]
    %v74 = vld [vmem:[#allocation5 + $0x20] sm:$0xf]
    %v75 = vld [vmem:[#allocation5 + $0x24] sm:$0xf]
    %v76 = vld [vmem:[#allocation5 + $0x28] sm:$0xf]
    %v77 = vld [vmem:[#allocation5 + $0x2c] sm:$0xf]
    %v78 = vld [vmem:[#allocation5 + $0x30] sm:$0xf]
    %v79 = vld [vmem:[#allocation5 + $0x34] sm:$0xf]
    %v80 = vld [vmem:[#allocation5 + $0x38] sm:$0xf]
    %v81 = vld [vmem:[#allocation5 + $0x3c] sm:$0xf]
    %v82 = vld [vmem:[#allocation5 + $0x40] sm:$0xf]
    %v83 = vld [vmem:[#allocation5 + $0x44] sm:$0xf]
    %v84 = vld [vmem:[#allocation5 + $0x48] sm:$0xf]
    %v85 = vld [vmem:[#allocation5 + $0x4c] sm:$0xf]
    %v86 = vld [vmem:[#allocation5 + $0x50] sm:$0xf]
    %v87 = vld [vmem:[#allocation5 + $0x54] sm:$0xf]
    %v88 = vld [vmem:[#allocation5 + $0x58] sm:$0xf]
    %v89 = vld [vmem:[#allocation5 + $0x5c] sm:$0xf]
    %v90 = vld [vmem:[#allocation5 + $0x60] sm:$0xf]
    %v91 = vld [vmem:[#allocation5 + $0x64] sm:$0xf]
    %v92 = vld [vmem:[#allocation5 + $0x68] sm:$0xf]
    %v93 = vld [vmem:[#allocation5 + $0x6c] sm:$0xf]
    %v94 = vld [vmem:[#allocation5 + $0x70] sm:$0xf]
    %v95 = vld [vmem:[#allocation5 + $0x74] sm:$0xf]
    %v96 = vld [vmem:[#allocation5 + $0x78] sm:$0xf]
    %v97 = vld [vmem:[#allocation5 + $0x7c] sm:$0xf]
    %v98 = vld [vmem:[#allocation7] sm:$0xf]
    %v99 = vld [vmem:[#allocation7 + $0x4] sm:$0xf]
    %v100 = vld [vmem:[#allocation7 + $0x8] sm:$0xf]
    %v101 = vld [vmem:[#allocation7 + $0xc] sm:$0xf]
    %v102 = vld [vmem:[#allocation7 + $0x10] sm:$0xf]
    %v103 = vld [vmem:[#allocation7 + $0x14] sm:$0xf]
    %v104 = vld [vmem:[#allocation7 + $0x18] sm:$0xf]
    %v105 = vld [vmem:[#allocation7 + $0x1c] sm:$0xf]
    %v106 = vld [vmem:[#allocation7 + $0x20] sm:$0xf]
    %v107 = vld [vmem:[#allocation7 + $0x24] sm:$0xf]
    %v108 = vld [vmem:[#allocation7 + $0x28] sm:$0xf]
    %v109 = vld [vmem:[#allocation7 + $0x2c] sm:$0xf]
    %v110 = vld [vmem:[#allocation7 + $0x30] sm:$0xf]
    %v111 = vld [vmem:[#allocation7 + $0x34] sm:$0xf]
    %v112 = vld [vmem:[#allocation7 + $0x38] sm:$0xf]
    %v113 = vld [vmem:[#allocation7 + $0x3c] sm:$0xf]
    %v114 = vld [vmem:[#allocation7 + $0x40] sm:$0xf]
    %v115 = vld [vmem:[#allocation7 + $0x44] sm:$0xf]
    %v116 = vld [vmem:[#allocation7 + $0x48] sm:$0xf]
    %v117 = vld [vmem:[#allocation7 + $0x4c] sm:$0xf]
    %v118 = vld [vmem:[#allocation7 + $0x50] sm:$0xf]
    %v119 = vld [vmem:[#allocation7 + $0x54] sm:$0xf]
    %v120 = vld [vmem:[#allocation7 + $0x58] sm:$0xf]
    %v121 = vld [vmem:[#allocation7 + $0x5c] sm:$0xf]
    %v122 = vld [vmem:[#allocation7 + $0x60] sm:$0xf]
    %v123 = vld [vmem:[#allocation7 + $0x64] sm:$0xf]
    %v124 = vld [vmem:[#allocation7 + $0x68] sm:$0xf]
    %v125 = vld [vmem:[#allocation7 + $0x6c] sm:$0xf]
    %v126 = vld [vmem:[#allocation7 + $0x70] sm:$0xf]
    %v127 = vld [vmem:[#allocation7 + $0x74] sm:$0xf]
    %v128 = vld [vmem:[#allocation7 + $0x78] sm:$0xf]
    %v129 = vld [vmem:[#allocation7 + $0x7c] sm:$0xf]
    %v146 = vunpack.c.l.b16 %v66
    %v147 = vunpack.c.l.b16 %v67
    %v148 = vunpack.c.l.b16 %v68
    %v149 = vunpack.c.l.b16 %v69
    %v150 = vunpack.c.l.b16 %v70
    %v151 = vunpack.c.l.b16 %v71
    %v152 = vunpack.c.l.b16 %v72
    %v153 = vunpack.c.l.b16 %v73
    %v154 = vunpack.c.l.b16 %v74
    %v155 = vunpack.c.l.b16 %v75
    %v156 = vunpack.c.l.b16 %v76
    %v157 = vunpack.c.l.b16 %v77
    %v158 = vunpack.c.l.b16 %v78
    %v159 = vunpack.c.l.b16 %v79
    %v160 = vunpack.c.l.b16 %v80
    %v161 = vunpack.c.l.b16 %v81
    %v162 = vpack.c.b16 %v147, %v146
    %v163 = vpack.c.b16 %v149, %v148
    %v164 = vpack.c.b16 %v151, %v150
    %v165 = vpack.c.b16 %v153, %v152
    %v166 = vpack.c.b16 %v155, %v154
    %v167 = vpack.c.b16 %v157, %v156
    %v168 = vpack.c.b16 %v159, %v158
    %v169 = vpack.c.b16 %v161, %v160
    %178 = vmatprep.subr.bf16.mxu0 0
    %179 = vmatpush1.bf16.msra.mxu0 %v162
    %180 = vmatprep.subr.bf16.mxu0 0
    %181 = vmatpush1.bf16.msra.mxu0 %v163
    %182 = vmatprep.subr.bf16.mxu0 0
    %183 = vmatpush1.bf16.msra.mxu0 %v164
    %184 = vmatprep.subr.bf16.mxu0 0
    %185 = vmatpush1.bf16.msra.mxu0 %v165
    %186 = vmatprep.subr.bf16.mxu0 0
    %187 = vmatpush1.bf16.msra.mxu0 %v166
    %188 = vmatprep.subr.bf16.mxu0 0
    %189 = vmatpush1.bf16.msra.mxu0 %v167
    %190 = vmatprep.subr.bf16.mxu0 0
    %191 = vmatpush1.bf16.msra.mxu0 %v168
    %192 = vmatprep.subr.bf16.mxu0 0
    %193 = vmatpush1.bf16.msra.mxu0 %v169
    %194 = vmatprep.subr.bf16.mxu0 0
    %195 = vmatpush1.bf16.msra.mxu0 0
    %196 = vmatprep.subr.bf16.mxu0 0
    %197 = vmatpush1.bf16.msra.mxu0 0
    %198 = vmatprep.subr.bf16.mxu0 0
    %199 = vmatpush1.bf16.msra.mxu0 0
    %200 = vmatprep.subr.bf16.mxu0 0
    %201 = vmatpush1.bf16.msra.mxu0 0
    %202 = vmatprep.subr.bf16.mxu0 0
    %203 = vmatpush1.bf16.msra.mxu0 0
    %204 = vmatprep.subr.bf16.mxu0 0
    %205 = vmatpush1.bf16.msra.mxu0 0
    %206 = vmatprep.subr.bf16.mxu0 0
    %207 = vmatpush1.bf16.msra.mxu0 0
    %208 = vmatprep.subr.bf16.mxu0 0
    %209 = vmatpush1.bf16.msra.mxu0 0
    %210 = vmatprep.mubr.bf16.mxu0 0
    %211 = vmatmul.mubr.bf16.gmra.mrb[0].mxu0 %v64
    %v212 = vpop.f32.mrb[0].mxu0
    %v213 = vadd.f32 0.0, %v212
    %v214 = vpop.f32.mrb[0].mxu0
    %v215 = vpop.f32.mrb[0].mxu0
    %v216 = vadd.f32 0.0, %v215
    %v217 = vpop.f32.mrb[0].mxu0
    %218 = vdwg.mxu0
    %v219 = vpack.c.bf16 %v216, %v213
    %220 = vmatprep.subr.bf16.mxu0 0
    %221 = vmatpush1.bf16.xpose.msra.mxu0 %v64
    %222 = vmatprep.subr.bf16.mxu0 0
    %223 = vmatpush1.bf16.xpose.msra.mxu0 0
    %224 = vmatprep.subr.bf16.mxu0 0
    %225 = vmatpush1.bf16.xpose.msra.mxu0 0
    %226 = vmatprep.subr.bf16.mxu0 0
    %227 = vmatpush1.bf16.xpose.msra.mxu0 0
    %228 = vmatprep.subr.bf16.mxu0 0
    %229 = vmatpush1.bf16.xpose.msra.mxu0 0
    %230 = vmatprep.subr.bf16.mxu0 0
    %231 = vmatpush1.bf16.xpose.msra.mxu0 0
    %232 = vmatprep.subr.bf16.mxu0 0
    %233 = vmatpush1.bf16.xpose.msra.mxu0 0
    %234 = vmatprep.subr.bf16.mxu0 0
    %235 = vmatpush1.bf16.xpose.msra.mxu0 0
    %236 = vmatprep.subr.bf16.mxu0 0
    %237 = vmatpush1.bf16.xpose.msra.mxu0 0
    %238 = vmatprep.subr.bf16.mxu0 0
    %239 = vmatpush1.bf16.xpose.msra.mxu0 0
    %240 = vmatprep.subr.bf16.mxu0 0
    %241 = vmatpush1.bf16.xpose.msra.mxu0 0
    %242 = vmatprep.subr.bf16.mxu0 0
    %243 = vmatpush1.bf16.xpose.msra.mxu0 0
    %244 = vmatprep.subr.bf16.mxu0 0
    %245 = vmatpush1.bf16.xpose.msra.mxu0 0
    %246 = vmatprep.subr.bf16.mxu0 0
    %247 = vmatpush1.bf16.xpose.msra.mxu0 0
    %248 = vmatprep.subr.bf16.mxu0 0
    %249 = vmatpush1.bf16.xpose.msra.mxu0 0
    %250 = vmatprep.subr.bf16.mxu0 0
    %251 = vmatpush1.bf16.xpose.msra.mxu0 0
    %252 = vmatprep.mubr.bf16.mxu0 0
    %253 = vmatmul.mubr.bf16.gmra.mrb[0].mxu0 %v219
    %v254 = vpop.f32.mrb[0].mxu0
    %v255 = vadd.f32 %v62, %v254
    %v256 = vpop.f32.mrb[0].mxu0
    %v257 = vpop.f32.mrb[0].mxu0
    %v258 = vadd.f32 %v63, %v257
    %v259 = vpop.f32.mrb[0].mxu0
    %260 = vdwg.mxu0
    %vm261 = vcmask 130048
    %v262 = vsel %vm261, %v255, -inf
    %263 = vmax.xlane.f32.xlu0 %v262
    %v264 = vpop.xlane.xlu0 %263
    %v265 = vsel %vm261, %v258, -inf
    %266 = vmax.xlane.f32.xlu0 %v265
    %v267 = vpop.xlane.xlu0 %266
    %v268 = vsub.f32 %v255, %v264
    %v269 = vsub.f32 %v258, %v267
    %v270 = vmul.f32 %v268, 1.442695
    %v271 = vpow.pop %v270
    %v272 = vmul.f32 %v269, 1.442695
    %v273 = vpow.pop %v272
    %v274 = vsel %vm261, %v271, 0.0
    %275 = vadd.xlane.f32.xlu0 %v274
    %v276 = vpop.xlane.xlu0 %275
    %v277 = vsel %vm261, %v273, 0.0
    %278 = vadd.xlane.f32.xlu0 %v277
    %v279 = vpop.xlane.xlu0 %278
    %v280 = vrcp.pop %v276
    %v281 = vrcp.pop %v279
    %v282 = vmul.f32 %v271, %v280
    %v283 = vmul.f32 %v273, %v281
    %v300 = vunpack.c.l.b16 %v82
    %v301 = vunpack.c.l.b16 %v83
    %v302 = vunpack.c.l.b16 %v84
    %v303 = vunpack.c.l.b16 %v85
    %v304 = vunpack.c.l.b16 %v86
    %v305 = vunpack.c.l.b16 %v87
    %v306 = vunpack.c.l.b16 %v88
    %v307 = vunpack.c.l.b16 %v89
    %v308 = vunpack.c.l.b16 %v90
    %v309 = vunpack.c.l.b16 %v91
    %v310 = vunpack.c.l.b16 %v92
    %v311 = vunpack.c.l.b16 %v93
    %v312 = vunpack.c.l.b16 %v94
    %v313 = vunpack.c.l.b16 %v95
    %v314 = vunpack.c.l.b16 %v96
    %v315 = vunpack.c.l.b16 %v97
    %v316 = vpack.c.b16 %v301, %v300
    %v317 = vpack.c.b16 %v303, %v302
    %v318 = vpack.c.b16 %v305, %v304
    %v319 = vpack.c.b16 %v307, %v306
    %v320 = vpack.c.b16 %v309, %v308
    %v321 = vpack.c.b16 %v311, %v310
    %v322 = vpack.c.b16 %v313, %v312
    %v323 = vpack.c.b16 %v315, %v314
    %332 = vmatprep.subr.bf16.mxu0 0
    %333 = vmatpush1.bf16.msra.mxu0 %v316
    %334 = vmatprep.subr.bf16.mxu0 0
    %335 = vmatpush1.bf16.msra.mxu0 %v317
    %336 = vmatprep.subr.bf16.mxu0 0
    %337 = vmatpush1.bf16.msra.mxu0 %v318
    %338 = vmatprep.subr.bf16.mxu0 0
    %339 = vmatpush1.bf16.msra.mxu0 %v319
    %340 = vmatprep.subr.bf16.mxu0 0
    %341 = vmatpush1.bf16.msra.mxu0 %v320
    %342 = vmatprep.subr.bf16.mxu0 0
    %343 = vmatpush1.bf16.msra.mxu0 %v321
    %344 = vmatprep.subr.bf16.mxu0 0
    %345 = vmatpush1.bf16.msra.mxu0 %v322
    %346 = vmatprep.subr.bf16.mxu0 0
    %347 = vmatpush1.bf16.msra.mxu0 %v323
    %348 = vmatprep.subr.bf16.mxu0 0
    %349 = vmatpush1.bf16.msra.mxu0 0
    %350 = vmatprep.subr.bf16.mxu0 0
    %351 = vmatpush1.bf16.msra.mxu0 0
    %352 = vmatprep.subr.bf16.mxu0 0
    %353 = vmatpush1.bf16.msra.mxu0 0
    %354 = vmatprep.subr.bf16.mxu0 0
    %355 = vmatpush1.bf16.msra.mxu0 0
    %356 = vmatprep.subr.bf16.mxu0 0
    %357 = vmatpush1.bf16.msra.mxu0 0
    %358 = vmatprep.subr.bf16.mxu0 0
    %359 = vmatpush1.bf16.msra.mxu0 0
    %360 = vmatprep.subr.bf16.mxu0 0
    %361 = vmatpush1.bf16.msra.mxu0 0
    %362 = vmatprep.subr.bf16.mxu0 0
    %363 = vmatpush1.bf16.msra.mxu0 0
    %364 = vmatprep.mubr.bf16.mxu0 0
    %365 = vmatmul.mubr.bf16.gmra.mrb[0].mxu0 %v64
    %v366 = vpop.f32.mrb[0].mxu0
    %v367 = vadd.f32 0.0, %v366
    %v368 = vpop.f32.mrb[0].mxu0
    %v369 = vpop.f32.mrb[0].mxu0
    %v370 = vadd.f32 0.0, %v369
    %v371 = vpop.f32.mrb[0].mxu0
    %372 = vdwg.mxu0
    %v373 = vpack.c.bf16 %v283, %v282
    %v374 = vpack.c.bf16 %v370, %v367
    %v376 = vsel %vm261, %v373, 0
    %378 = vmatprep.subr.bf16.mxu0 0
    %379 = vmatpush1.bf16.msra.mxu0 %v374
    %380 = vmatprep.subr.bf16.mxu0 0
    %381 = vmatpush1.bf16.msra.mxu0 0
    %382 = vmatprep.subr.bf16.mxu0 0
    %383 = vmatpush1.bf16.msra.mxu0 0
    %384 = vmatprep.subr.bf16.mxu0 0
    %385 = vmatpush1.bf16.msra.mxu0 0
    %386 = vmatprep.subr.bf16.mxu0 0
    %387 = vmatpush1.bf16.msra.mxu0 0
    %388 = vmatprep.subr.bf16.mxu0 0
    %389 = vmatpush1.bf16.msra.mxu0 0
    %390 = vmatprep.subr.bf16.mxu0 0
    %391 = vmatpush1.bf16.msra.mxu0 0
    %392 = vmatprep.subr.bf16.mxu0 0
    %393 = vmatpush1.bf16.msra.mxu0 0
    %394 = vmatprep.subr.bf16.mxu0 0
    %395 = vmatpush1.bf16.msra.mxu0 0
    %396 = vmatprep.subr.bf16.mxu0 0
    %397 = vmatpush1.bf16.msra.mxu0 0
    %398 = vmatprep.subr.bf16.mxu0 0
    %399 = vmatpush1.bf16.msra.mxu0 0
    %400 = vmatprep.subr.bf16.mxu0 0
    %401 = vmatpush1.bf16.msra.mxu0 0
    %402 = vmatprep.subr.bf16.mxu0 0
    %403 = vmatpush1.bf16.msra.mxu0 0
    %404 = vmatprep.subr.bf16.mxu0 0
    %405 = vmatpush1.bf16.msra.mxu0 0
    %406 = vmatprep.subr.bf16.mxu0 0
    %407 = vmatpush1.bf16.msra.mxu0 0
    %408 = vmatprep.subr.bf16.mxu0 0
    %409 = vmatpush1.bf16.msra.mxu0 0
    %410 = vmatprep.mubr.bf16.mxu0 0
    %411 = vmatmul.mubr.bf16.gmra.mrb[0].mxu0 %v376
    %v412 = vpop.f32.mrb[0].mxu0
    %v413 = vadd.f32 0.0, %v412
    %v414 = vpop.f32.mrb[0].mxu0
    %v415 = vpop.f32.mrb[0].mxu0
    %v416 = vadd.f32 0.0, %v415
    %v417 = vpop.f32.mrb[0].mxu0
    %418 = vdwg.mxu0
    %v419 = vlaneseq
    %v420 = vand.u32 %v419, 127
    %vm421 = vcmp.lt.s32.totalorder %v420, 32
    %v422 = vsel %vm421, 1, 0
    %v423 = vcvt.s32.f32 %v422
    %v424 = vadd.f32 %v60, %v413
    %v425 = vadd.f32 %v61, %v416
    %426 = vadd.xlane.f32.xlu0 %v424
    %v427 = vpop.xlane.xlu0 %426
    %428 = vadd.xlane.f32.xlu0 %v425
    %v429 = vpop.xlane.xlu0 %428
    %v430 = vmul.f32 %v427, 0.03125
    %v431 = vmul.f32 %v429, 0.03125
    %v432 = vsub.f32 %v424, %v430
    %v433 = vsub.f32 %v425, %v431
    %v434 = vmul.f32 %v432, %v423
    %v435 = vmul.f32 %v433, %v423
    %v436 = vmul.f32 %v434, %v434
    %v437 = vmul.f32 %v435, %v435
    %438 = vadd.xlane.f32.xlu0 %v436
    %v439 = vpop.xlane.xlu0 %438
    %440 = vadd.xlane.f32.xlu0 %v437
    %v441 = vpop.xlane.xlu0 %440
    %v442 = vmul.f32 %v439, 0.03125
    %v443 = vmul.f32 %v441, 0.03125
    %v444 = vadd.f32 %v442, 1e-05
    %v445 = vadd.f32 %v443, 1e-05
    %v446 = vrsqrt.pop %v444
    %v447 = vrsqrt.pop %v445
    %v448 = vmul.f32 %v434, %v446
    %v449 = vmul.f32 %v435, %v447
    %v450 = vlaneseq
    %v451 = vshrl.u32 %v450, 7
    %v452 = vsub.s32 0, %v451
    %v453 = vrot.slane %v65, %v452
    %v454 = vmul.f32 %v448, %v453
    %v455 = vmul.f32 %v449, %v453
    %v456 = vlaneseq
    %v457 = vshrl.u32 %v456, 7
    %v458 = vsub.s32 1, %v457
    %v459 = vrot.slane %v65, %v458
    %v460 = vadd.f32 %v454, %v459
    %v461 = vadd.f32 %v455, %v459
    %v462 = vpack.c.bf16 %v461, %v460
    %v463 = vlaneseq
    %v464 = vshrl.u32 %v463, 7
    %v465 = vsub.s32 2, %v464
    %v466 = vrot.slane %v65, %v465
    %v483 = vunpack.c.l.b16 %v98
    %v484 = vunpack.c.l.b16 %v99
    %v485 = vunpack.c.l.b16 %v100
    %v486 = vunpack.c.l.b16 %v101
    %v487 = vunpack.c.l.b16 %v102
    %v488 = vunpack.c.l.b16 %v103
    %v489 = vunpack.c.l.b16 %v104
    %v490 = vunpack.c.l.b16 %v105
    %v491 = vunpack.c.l.b16 %v106
    %v492 = vunpack.c.l.b16 %v107
    %v493 = vunpack.c.l.b16 %v108
    %v494 = vunpack.c.l.b16 %v109
    %v495 = vunpack.c.l.b16 %v110
    %v496 = vunpack.c.l.b16 %v111
    %v497 = vunpack.c.l.b16 %v112
    %v498 = vunpack.c.l.b16 %v113
    %v499 = vpack.c.b16 %v484, %v483
    %v500 = vpack.c.b16 %v486, %v485
    %v501 = vpack.c.b16 %v488, %v487
    %v502 = vpack.c.b16 %v490, %v489
    %v503 = vpack.c.b16 %v492, %v491
    %v504 = vpack.c.b16 %v494, %v493
    %v505 = vpack.c.b16 %v496, %v495
    %v506 = vpack.c.b16 %v498, %v497
    %515 = vmatprep.subr.bf16.mxu0 0
    %516 = vmatpush1.bf16.msra.mxu0 %v499
    %517 = vmatprep.subr.bf16.mxu0 0
    %518 = vmatpush1.bf16.msra.mxu0 %v500
    %519 = vmatprep.subr.bf16.mxu0 0
    %520 = vmatpush1.bf16.msra.mxu0 %v501
    %521 = vmatprep.subr.bf16.mxu0 0
    %522 = vmatpush1.bf16.msra.mxu0 %v502
    %523 = vmatprep.subr.bf16.mxu0 0
    %524 = vmatpush1.bf16.msra.mxu0 %v503
    %525 = vmatprep.subr.bf16.mxu0 0
    %526 = vmatpush1.bf16.msra.mxu0 %v504
    %527 = vmatprep.subr.bf16.mxu0 0
    %528 = vmatpush1.bf16.msra.mxu0 %v505
    %529 = vmatprep.subr.bf16.mxu0 0
    %530 = vmatpush1.bf16.msra.mxu0 %v506
    %531 = vmatprep.subr.bf16.mxu0 0
    %532 = vmatpush1.bf16.msra.mxu0 0
    %533 = vmatprep.subr.bf16.mxu0 0
    %534 = vmatpush1.bf16.msra.mxu0 0
    %535 = vmatprep.subr.bf16.mxu0 0
    %536 = vmatpush1.bf16.msra.mxu0 0
    %537 = vmatprep.subr.bf16.mxu0 0
    %538 = vmatpush1.bf16.msra.mxu0 0
    %539 = vmatprep.subr.bf16.mxu0 0
    %540 = vmatpush1.bf16.msra.mxu0 0
    %541 = vmatprep.subr.bf16.mxu0 0
    %542 = vmatpush1.bf16.msra.mxu0 0
    %543 = vmatprep.subr.bf16.mxu0 0
    %544 = vmatpush1.bf16.msra.mxu0 0
    %545 = vmatprep.subr.bf16.mxu0 0
    %546 = vmatpush1.bf16.msra.mxu0 0
    %547 = vmatprep.mubr.bf16.mxu0 0
    %548 = vmatmul.mubr.bf16.gmra.mrb[0].mxu0 %v462
    %v549 = vpop.f32.mrb[0].mxu0
    %v550 = vadd.f32 %v466, %v549
    %v551 = vpop.f32.mrb[0].mxu0
    %v552 = vpop.f32.mrb[0].mxu0
    %v553 = vadd.f32 %v466, %v552
    %v554 = vpop.f32.mrb[0].mxu0
    %555 = vdwg.mxu0
    %v556 = vmul.f32 %v550, 0.5
    %v557 = vmul.f32 %v553, 0.5
    %v558 = vmul.f32 %v550, 0.044715
    %v559 = vmul.f32 %v553, 0.044715
    %v560 = vmul.f32 %v558, %v550
    %v561 = vmul.f32 %v559, %v553
    %v562 = vmul.f32 %v560, %v550
    %v563 = vmul.f32 %v561, %v553
    %v564 = vadd.f32 %v550, %v562
    %v565 = vadd.f32 %v553, %v563
    %v566 = vmul.f32 %v564, 0.7978846
    %v567 = vmul.f32 %v565, 0.7978846
    %v568 = vtanh.pop %v566
    %v569 = vtanh.pop %v567
    %v570 = vadd.f32 %v568, 1.0
    %v571 = vadd.f32 %v569, 1.0
    %v572 = vmul.f32 %v556, %v570
    %v573 = vmul.f32 %v557, %v571
    %v574 = vpack.c.bf16 %v573, %v572
    %v575 = vlaneseq
    %v576 = vshrl.u32 %v575, 7
    %v577 = vsub.s32 3, %v576
    %v578 = vrot.slane %v65, %v577
    %v595 = vunpack.c.l.b16 %v114
    %v596 = vunpack.c.l.b16 %v115
    %v597 = vunpack.c.l.b16 %v116
    %v598 = vunpack.c.l.b16 %v117
    %v599 = vunpack.c.l.b16 %v118
    %v600 = vunpack.c.l.b16 %v119
    %v601 = vunpack.c.l.b16 %v120
    %v602 = vunpack.c.l.b16 %v121
    %v603 = vunpack.c.l.b16 %v122
    %v604 = vunpack.c.l.b16 %v123
    %v605 = vunpack.c.l.b16 %v124
    %v606 = vunpack.c.l.b16 %v125
    %v607 = vunpack.c.l.b16 %v126
    %v608 = vunpack.c.l.b16 %v127
    %v609 = vunpack.c.l.b16 %v128
    %v610 = vunpack.c.l.b16 %v129
    %v611 = vpack.c.b16 %v596, %v595
    %v612 = vpack.c.b16 %v598, %v597
    %v613 = vpack.c.b16 %v600, %v599
    %v614 = vpack.c.b16 %v602, %v601
    %v615 = vpack.c.b16 %v604, %v603
    %v616 = vpack.c.b16 %v606, %v605
    %v617 = vpack.c.b16 %v608, %v607
    %v618 = vpack.c.b16 %v610, %v609
    %627 = vmatprep.subr.bf16.mxu0 0
    %628 = vmatpush1.bf16.msra.mxu0 %v611
    %629 = vmatprep.subr.bf16.mxu0 0
    %630 = vmatpush1.bf16.msra.mxu0 %v612
    %631 = vmatprep.subr.bf16.mxu0 0
    %632 = vmatpush1.bf16.msra.mxu0 %v613
    %633 = vmatprep.subr.bf16.mxu0 0
    %634 = vmatpush1.bf16.msra.mxu0 %v614
    %635 = vmatprep.subr.bf16.mxu0 0
    %636 = vmatpush1.bf16.msra.mxu0 %v615
    %637 = vmatprep.subr.bf16.mxu0 0
    %638 = vmatpush1.bf16.msra.mxu0 %v616
    %639 = vmatprep.subr.bf16.mxu0 0
    %640 = vmatpush1.bf16.msra.mxu0 %v617
    %641 = vmatprep.subr.bf16.mxu0 0
    %642 = vmatpush1.bf16.msra.mxu0 %v618
    %643 = vmatprep.subr.bf16.mxu0 0
    %644 = vmatpush1.bf16.msra.mxu0 0
    %645 = vmatprep.subr.bf16.mxu0 0
    %646 = vmatpush1.bf16.msra.mxu0 0
    %647 = vmatprep.subr.bf16.mxu0 0
    %648 = vmatpush1.bf16.msra.mxu0 0
    %649 = vmatprep.subr.bf16.mxu0 0
    %650 = vmatpush1.bf16.msra.mxu0 0
    %651 = vmatprep.subr.bf16.mxu0 0
    %652 = vmatpush1.bf16.msra.mxu0 0
    %653 = vmatprep.subr.bf16.mxu0 0
    %654 = vmatpush1.bf16.msra.mxu0 0
    %655 = vmatprep.subr.bf16.mxu0 0
    %656 = vmatpush1.bf16.msra.mxu0 0
    %657 = vmatprep.subr.bf16.mxu0 0
    %658 = vmatpush1.bf16.msra.mxu0 0
    %659 = vmatprep.mubr.bf16.mxu0 0
    %660 = vmatmul.mubr.bf16.gmra.mrb[0].mxu0 %v574
    %v661 = vpop.f32.mrb[0].mxu0
    %v662 = vadd.f32 %v578, %v661
    %v663 = vpop.f32.mrb[0].mxu0
    %v664 = vpop.f32.mrb[0].mxu0
    %v665 = vadd.f32 %v578, %v664
    %v666 = vpop.f32.mrb[0].mxu0
    %667 = vdwg.mxu0
    %v668 = vadd.f32 %v460, %v662
    %v669 = vadd.f32 %v461, %v665
    %670 = vadd.xlane.f32.xlu0 %v668
    %v671 = vpop.xlane.xlu0 %670
    %672 = vadd.xlane.f32.xlu0 %v669
    %v673 = vpop.xlane.xlu0 %672
    %v674 = vmul.f32 %v671, 0.03125
    %v675 = vmul.f32 %v673, 0.03125
    %v676 = vsub.f32 %v668, %v674
    %v677 = vsub.f32 %v669, %v675
    %v678 = vmul.f32 %v676, %v423
    %v679 = vmul.f32 %v677, %v423
    %v680 = vmul.f32 %v678, %v678
    %v681 = vmul.f32 %v679, %v679
    %682 = vadd.xlane.f32.xlu0 %v680
    %v683 = vpop.xlane.xlu0 %682
    %684 = vadd.xlane.f32.xlu0 %v681
    %v685 = vpop.xlane.xlu0 %684
    %v686 = vmul.f32 %v683, 0.03125
    %v687 = vmul.f32 %v685, 0.03125
    %v688 = vadd.f32 %v686, 1e-05
    %v689 = vadd.f32 %v687, 1e-05
    %v690 = vrsqrt.pop %v688
    %v691 = vrsqrt.pop %v689
    %v692 = vmul.f32 %v678, %v690
    %v693 = vmul.f32 %v679, %v691
    %v694 = vlaneseq
    %v695 = vshrl.u32 %v694, 7
    %v696 = vsub.s32 4, %v695
    %v697 = vrot.slane %v65, %v696
    %v698 = vmul.f32 %v692, %v697
    %v699 = vmul.f32 %v693, %v697
    %v700 = vlaneseq
    %v701 = vshrl.u32 %v700, 7
    %v702 = vsub.s32 5, %v701
    %v703 = vrot.slane %v65, %v702
    %v704 = vadd.f32 %v698, %v703
    %v705 = vadd.f32 %v699, %v703
    %706 = vst [vmem:[#allocation8] sm:$0xff] %v704
    %707 = vst [vmem:[#allocation8 + $0x8] sm:$0xff] %v705
    // Predicated region
    $region30: #{tpu_custom_call.1} parent=1 // pred_check
      _
    $region31: #{tpu_custom_call.1} parent=1 // pred_check_branch
      %709 = sbr.rel (0) target = $region33
    $region32: #{tpu_custom_call.1} parent=1 // pred_region
      %s711 = ssub.s32 256, 256
      %712 = vsyncadd [#allocation4], %s711
      %s713 = sshll.u32 [#allocation8], 4
      %s714 = int_to_ptr.vmem [resolvable:$true] %s713
      %719 = dma.vmem_to_hbm [thread:$0]  %s714, 256, %s4, [#allocation4], 128, 128, 8
    $region33: #{tpu_custom_call.1} parent=1 // pred_fallthru
      _
    // Predicated region
    $region34: #{tpu_custom_call.1} parent=1 // pred_check
      _
    $region35: #{tpu_custom_call.1} parent=1 // pred_check_branch
      %721 = sbr.rel (0) target = $region37
    $region36: #{tpu_custom_call.1} parent=1 // pred_region
      %722 = dma.done [#allocation4], 256
    $region37: #{tpu_custom_call.1} parent=1 // pred_fallthru
      _
    %723 = vsyncpa [#allocation3], 1
    %724 = vsyncpa [#allocation6], 1
    %725 = vsyncpa [#allocation4], 1

</llo_original>
